<compile_context>
chip_gen: v5e
topology: v5e:2x2
jax: 0.10.0
libtpu: 0.0.40
codegen_flags: <defaults>
</compile_context>

<pallas_src>
import functools

import jax
import jax.numpy as jnp
from jax.experimental import pallas as pl
from jax.experimental.pallas import tpu as pltpu


def _round_up(x: int, m: int) -> int:
    return ((x + m - 1) // m) * m


def knn_kernel(test_ref, train_ref, idx_ref,
               xn_ref, flat_ref, best_val_ref, best_idx_ref,
               *, n_train: int):
    # test_ref : (B_pad, D_pad) f32   -- resident across the grid
    # train_ref: (D_pad, TN)    bf16  -- streamed tile k of the (D_pad, N_pad) train matrix
    # idx_ref  : (1,)           i32   -- SMEM scalar output (flat argmax over (B, N))
    # xn_ref   : (B_pad, D_pad) bf16  -- normalized test rows (computed once)
    # flat_ref : (B_pad, TN)    i32   -- flat-index base row*n_train + local_col (computed once)
    # best_*   : (1, 1)               -- running (max value, min flat index at max)
    k = pl.program_id(0)
    tn = train_ref.shape[1]

    @pl.when(k == 0)
    def _init():
        x = test_ref[...]                                              # (B_pad, D_pad) f32
        ssq = jnp.sum(x * x, axis=-1, keepdims=True)                   # (B_pad, 1)
        # F.normalize(x, dim=1, p=2): x / max(||x||, 1e-12)  == x * rsqrt(max(||x||^2, 1e-24))
        inv = jax.lax.rsqrt(jnp.maximum(ssq, jnp.float32(1e-24)))
        xn_ref[...] = (x * inv).astype(jnp.bfloat16)

        b, t = flat_ref.shape
        row = jax.lax.broadcasted_iota(jnp.int32, (b, t), 0)
        col = jax.lax.broadcasted_iota(jnp.int32, (b, t), 1)
        flat_ref[...] = row * jnp.int32(n_train) + col                 # flat index for tile 0

        best_val_ref[...] = jnp.full((1, 1), -jnp.inf, dtype=jnp.float32)
        best_idx_ref[...] = jnp.full((1, 1), 2**31 - 1, dtype=jnp.int32)

    # similarity tile on the MXU: (B_pad, D_pad) bf16 x (D_pad, TN) bf16 -> (B_pad, TN) f32.
    sim = jax.lax.dot_general(
        xn_ref[...], train_ref[...],
        dimension_numbers=(((1,), (0,)), ((), ())),
        preferred_element_type=jnp.float32,
    )

    # Flat indices of this tile: loop-invariant base + scalar column offset.
    flat = flat_ref[...] + k * tn                                      # (B_pad, TN) i32

    # Tile-local (max, first-occurrence flat index at max); keepdims keeps everything 2-D.
    m_row = jnp.max(sim, axis=-1, keepdims=True)                       # (B_pad, 1)
    tile_max = jnp.max(m_row, axis=0, keepdims=True)                   # (1, 1)
    big = jnp.int32(2**31 - 1)
    cand = jnp.where(sim == tile_max, flat, big)                       # (B_pad, TN)
    i_row = jnp.min(cand, axis=-1, keepdims=True)                      # (B_pad, 1)
    tile_idx = jnp.min(i_row, axis=0, keepdims=True)                   # (1, 1)

    # Running reduction with first-occurrence tie-break (min flat index on equal max).
    bv = best_val_ref[...]
    bi = best_idx_ref[...]
    better = tile_max > bv
    equal = tile_max == bv
    best_val_ref[...] = jnp.maximum(bv, tile_max)
    best_idx_ref[...] = jnp.where(
        better, tile_idx, jnp.where(equal, jnp.minimum(bi, tile_idx), bi))

    @pl.when(k == pl.num_programs(0) - 1)
    def _finalize():
        bi_final = best_idx_ref[...]
        idx_ref[0] = bi_final[0, 0]


def prepare_train_features(train_features, *, tn=512):
    """KNN.__init__ equivalent + kernel packing.

    L2-normalize rows (f32), zero-pad the feature dim to a multiple of 128, cast to bf16,
    transpose to (D_pad, N), edge-pad N to a multiple of `tn`.  Duplicated padding
    rows/columns cannot change the flattened-argmax result.
    """
    tf = train_features.astype(jnp.float32)
    nrm = jnp.sqrt(jnp.sum(tf * tf, axis=1, keepdims=True))
    tf = tf / jnp.maximum(nrm, 1e-12)                                  # F.normalize at init
    n, d = tf.shape
    d_pad = _round_up(d, 128)
    if d_pad > d:
        tf = jnp.pad(tf, ((0, 0), (0, d_pad - d)))                     # zeros: no effect on dots
    tf = tf.astype(jnp.bfloat16).T                                     # (D_pad, N), N on lanes
    n_pad = _round_up(n, tn)
    if n_pad > n:
        tf = jnp.pad(tf, ((0, 0), (0, n_pad - n)), mode="edge")        # duplicate last column
    return tf


@functools.partial(jax.jit, static_argnames=("n_train", "tn"))
def knn_forward(test_features, train_t, train_labels, *, n_train, tn):
    """Pallas-backed KNN.forward. Returns train_labels[similarity.argmax()]."""
    b, d = test_features.shape
    d_pad, n_pad = train_t.shape
    b_pad = _round_up(max(b, 8), 8)

    x = test_features.astype(jnp.float32)
    if d_pad > d:
        x = jnp.pad(x, ((0, 0), (0, d_pad - d)))                       # zero-pad feature dim
    if b_pad > b:
        x = jnp.pad(x, ((0, b_pad - b), (0, 0)), mode="edge")          # duplicate last row

    grid = n_pad // tn
    kernel = functools.partial(knn_kernel, n_train=n_train)

    idx = pl.pallas_call(
        kernel,
        out_shape=jax.ShapeDtypeStruct((1,), jnp.int32),
        grid_spec=pltpu.PrefetchScalarGridSpec(
            num_scalar_prefetch=0,
            grid=(grid,),
            in_specs=[
                pl.BlockSpec((b_pad, d_pad), lambda k: (0, 0)),        # resident test block
                pl.BlockSpec((d_pad, tn), lambda k: (0, k)),           # streamed train tile
            ],
            out_specs=pl.BlockSpec(memory_space=pltpu.MemorySpace.SMEM),
            scratch_shapes=[
                pltpu.VMEM((b_pad, d_pad), jnp.bfloat16),              # normalized test (bf16)
                pltpu.VMEM((b_pad, tn), jnp.int32),                    # flat-index base
                pltpu.VMEM((1, 1), jnp.float32),                       # running max
                pltpu.VMEM((1, 1), jnp.int32),                         # running flat argmax
            ],
        ),
        compiler_params=pltpu.CompilerParams(
            dimension_semantics=("arbitrary",),                        # N axis carries the reduction
            vmem_limit_bytes=32 * 1024 * 1024,
        ),
        cost_estimate=pl.CostEstimate(
            flops=2 * b_pad * n_pad * d_pad,
            transcendentals=b_pad,
            bytes_accessed=n_pad * d_pad * 2 + b_pad * d_pad * 4 + 4,
        ),
    )(x, train_t)

    flat_idx = idx[0]
    # NOTE: faithful to the PyTorch module: the argmax of the *flattened* (B, N) similarity
    # matrix indexes train_labels (length N).  JAX clamps out-of-bounds gathers where PyTorch
    # would raise for flat_idx >= N (only possible when B > 1).
    return train_labels[flat_idx]


if __name__ == "__main__":
    key = jax.random.PRNGKey(0)
    k_train, k_labels, k_test = jax.random.split(key, 3)

    n_train, d, n_test, n_classes = 300, 48, 2, 10
    tn = 128  # small tile for the demo; real deployments use 512+ (multiple of 128)

    # "Parameters" set up deterministically in-script (KNN.__init__ equivalent).
    train_features_raw = jax.random.normal(k_train, (n_train, d), dtype=jnp.float32)
    train_labels = jax.random.randint(k_labels, (n_train,), 0, n_classes, dtype=jnp.int32)
    train_t = prepare_train_features(train_features_raw, tn=tn)       # (D_pad, N_pad) bf16

    # Forward input.
    test_features = jax.random.normal(k_test, (n_test, d), dtype=jnp.float32)

    pred = knn_forward(test_features, train_t, train_labels, n_train=n_train, tn=tn)
    pred = jax.block_until_ready(pred)

    # Pure-JAX reference of the same forward pass at the kernel's stored (bf16) precision.
    tf = train_features_raw.astype(jnp.float32)
    tf = tf / jnp.maximum(jnp.sqrt(jnp.sum(tf * tf, axis=1, keepdims=True)), 1e-12)
    train_param = tf.astype(jnp.bfloat16).astype(jnp.float32)         # stored bf16 parameter
    x = test_features.astype(jnp.float32)
    xn = x * jax.lax.rsqrt(jnp.maximum(jnp.sum(x * x, axis=1, keepdims=True), 1e-24))
    xn = xn.astype(jnp.bfloat16).astype(jnp.float32)
    sim_ref = xn @ train_param.T                                      # (B, N)
    ref_pred = train_labels[jnp.argmax(sim_ref)]

    assert int(pred) == int(ref_pred), (int(pred), int(ref_pred))
    print("KERNEL_OK")
</pallas_src>

<mosaic_0001>
module attributes {stable_mosaic.version = 11 : i64} {
  func.func @knn_kernel(%arg0: i32, %arg1: memref<8x128xf32, #tpu.memory_space<vmem>>, %arg2: memref<128x128xbf16, #tpu.memory_space<vmem>>, %arg3: memref<1xi32, #tpu.memory_space<smem>>, %arg4: memref<8x128xbf16, #tpu.memory_space<vmem>>, %arg5: memref<8x128xi32, #tpu.memory_space<vmem>>, %arg6: memref<1x1xf32, #tpu.memory_space<vmem>>, %arg7: memref<1x1xi32, #tpu.memory_space<vmem>>) attributes {dimension_semantics = [#tpu.dimension_semantics<arbitrary>], iteration_bounds = array<i64: 3>, scalar_prefetch = 0 : i64, scratch_operands = 4 : i64, tpu.core_type = #tpu.core_type<tc>, window_params = [{pipeline_mode = #tpu.pipeline_mode<synchronous>, transform_indices = @transform_0, window_bounds = array<i64: 8, 128>}, {transform_indices = @transform_1, window_bounds = array<i64: 128, 128>}, {transform_indices = @transform_2, window_bounds = array<i64: 1>}]} {
    %c0_i32 = arith.constant 0 : i32
    %0 = arith.cmpi eq, %arg0, %c0_i32 : i32
    %1 = arith.extui %0 : i1 to i32
    %c0_i32_0 = arith.constant 0 : i32
    %2 = arith.cmpi ne, %1, %c0_i32_0 : i32
    scf.if %2 {
      %c0_19 = arith.constant 0 : index
      %c0_20 = arith.constant 0 : index
      %35 = vector.load %arg1[%c0_19, %c0_20] : memref<8x128xf32, #tpu.memory_space<vmem>>, vector<8x128xf32>
      %36 = arith.mulf %35, %35 : vector<8x128xf32>
      %cst_21 = arith.constant dense<0.000000e+00> : vector<8xf32>
      %37 = vector.multi_reduction <add>, %36, %cst_21 [1] : vector<8x128xf32> to vector<8xf32>
      %38 = vector.shape_cast %37 : vector<8xf32> to vector<8x1xf32>
      %cst_22 = arith.constant 1.000000e-24 : f32
      %39 = vector.broadcast %cst_22 : f32 to vector<8x1xf32>
      %40 = arith.maximumf %38, %39 : vector<8x1xf32>
      %41 = math.rsqrt %40 : vector<8x1xf32>
      %42 = vector.broadcast %41 : vector<8x1xf32> to vector<8x128xf32>
      %43 = arith.mulf %35, %42 : vector<8x128xf32>
      %44 = arith.truncf %43 : vector<8x128xf32> to vector<8x128xbf16>
      %c0_23 = arith.constant 0 : index
      %c0_24 = arith.constant 0 : index
      %45 = vector.load %arg4[%c0_23, %c0_24] : memref<8x128xbf16, #tpu.memory_space<vmem>>, vector<8x128xbf16>
      tpu.vector_store %arg4[%c0_23, %c0_24], %44 {strides = array<i32>} : memref<8x128xbf16, #tpu.memory_space<vmem>>, vector<8x128xbf16>,
      %46 = tpu.iota {dimensions = array<i32: 0>} : vector<8x128xi32>
      %47 = tpu.iota {dimensions = array<i32: 1>} : vector<8x128xi32>
      %c300_i32 = arith.constant 300 : i32
      %48 = vector.broadcast %c300_i32 : i32 to vector<8x128xi32>
      %49 = arith.muli %46, %48 : vector<8x128xi32>
      %50 = arith.addi %49, %47 : vector<8x128xi32>
      %c0_25 = arith.constant 0 : index
      %c0_26 = arith.constant 0 : index
      %51 = vector.load %arg5[%c0_25, %c0_26] : memref<8x128xi32, #tpu.memory_space<vmem>>, vector<8x128xi32>
      tpu.vector_store %arg5[%c0_25, %c0_26], %50 {strides = array<i32>} : memref<8x128xi32, #tpu.memory_space<vmem>>, vector<8x128xi32>,
      %cst_27 = arith.constant 0xFF800000 : f32
      %52 = vector.broadcast %cst_27 : f32 to vector<1x1xf32>
      %c0_28 = arith.constant 0 : index
      %c0_29 = arith.constant 0 : index
      %53 = vector.load %arg6[%c0_28, %c0_29] : memref<1x1xf32, #tpu.memory_space<vmem>>, vector<1x1xf32>
      tpu.vector_store %arg6[%c0_28, %c0_29], %52 {strides = array<i32>} : memref<1x1xf32, #tpu.memory_space<vmem>>, vector<1x1xf32>,
      %c2147483647_i32_30 = arith.constant 2147483647 : i32
      %54 = vector.broadcast %c2147483647_i32_30 : i32 to vector<1x1xi32>
      %c0_31 = arith.constant 0 : index
      %c0_32 = arith.constant 0 : index
      %55 = vector.load %arg7[%c0_31, %c0_32] : memref<1x1xi32, #tpu.memory_space<vmem>>, vector<1x1xi32>
      tpu.vector_store %arg7[%c0_31, %c0_32], %54 {strides = array<i32>} : memref<1x1xi32, #tpu.memory_space<vmem>>, vector<1x1xi32>,
    } else {
    }
    %c0 = arith.constant 0 : index
    %c0_1 = arith.constant 0 : index
    %3 = vector.load %arg4[%c0, %c0_1] : memref<8x128xbf16, #tpu.memory_space<vmem>>, vector<8x128xbf16>
    %c0_2 = arith.constant 0 : index
    %c0_3 = arith.constant 0 : index
    %4 = vector.load %arg2[%c0_2, %c0_3] : memref<128x128xbf16, #tpu.memory_space<vmem>>, vector<128x128xbf16>
    %cst = arith.constant dense<0.000000e+00> : vector<8x128xf32>
    %5 = tpu.matmul %3, %4, %cst {dimension_numbers = #tpu.dot_dimension_numbers<[1], [0], [0], [1], [0, 0, 1, 1], [], []>} : vector<8x128xbf16>, vector<128x128xbf16>, vector<8x128xf32> -> vector<8x128xf32>
    %c0_4 = arith.constant 0 : index
    %c0_5 = arith.constant 0 : index
    %6 = vector.load %arg5[%c0_4, %c0_5] : memref<8x128xi32, #tpu.memory_space<vmem>>, vector<8x128xi32>
    %c128_i32 = arith.constant 128 : i32
    %7 = arith.muli %arg0, %c128_i32 : i32
    %8 = vector.broadcast %7 : i32 to vector<8x128xi32>
    %9 = arith.addi %6, %8 : vector<8x128xi32>
    %cst_6 = arith.constant dense<0xFF800000> : vector<8xf32>
    %10 = vector.multi_reduction <maximumf>, %5, %cst_6 [1] : vector<8x128xf32> to vector<8xf32>
    %11 = vector.shape_cast %10 : vector<8xf32> to vector<8x1xf32>
    %cst_7 = arith.constant dense<0xFF800000> : vector<1xf32>
    %12 = vector.multi_reduction <maximumf>, %11, %cst_7 [0] : vector<8x1xf32> to vector<1xf32>
    %13 = vector.shape_cast %12 : vector<1xf32> to vector<1x1xf32>
    %14 = vector.broadcast %13 : vector<1x1xf32> to vector<8x128xf32>
    %15 = arith.cmpf oeq, %5, %14 : vector<8x128xf32>
    %c2147483647_i32 = arith.constant 2147483647 : i32
    %16 = vector.broadcast %c2147483647_i32 : i32 to vector<8x128xi32>
    %17 = arith.select %15, %9, %16 : vector<8x128xi1>, vector<8x128xi32>
    %cst_8 = arith.constant dense<2147483647> : vector<8xi32>
    %18 = vector.multi_reduction <minsi>, %17, %cst_8 [1] : vector<8x128xi32> to vector<8xi32>
    %19 = vector.shape_cast %18 : vector<8xi32> to vector<8x1xi32>
    %cst_9 = arith.constant dense<2147483647> : vector<1xi32>
    %20 = vector.multi_reduction <minsi>, %19, %cst_9 [0] : vector<8x1xi32> to vector<1xi32>
    %21 = vector.shape_cast %20 : vector<1xi32> to vector<1x1xi32>
    %c0_10 = arith.constant 0 : index
    %c0_11 = arith.constant 0 : index
    %22 = vector.load %arg6[%c0_10, %c0_11] : memref<1x1xf32, #tpu.memory_space<vmem>>, vector<1x1xf32>
    %c0_12 = arith.constant 0 : index
    %c0_13 = arith.constant 0 : index
    %23 = vector.load %arg7[%c0_12, %c0_13] : memref<1x1xi32, #tpu.memory_space<vmem>>, vector<1x1xi32>
    %24 = arith.cmpf ogt, %13, %22 : vector<1x1xf32>
    %25 = arith.cmpf oeq, %13, %22 : vector<1x1xf32>
    %26 = arith.maximumf %22, %13 : vector<1x1xf32>
    %c0_14 = arith.constant 0 : index
    %c0_15 = arith.constant 0 : index
    %27 = vector.load %arg6[%c0_14, %c0_15] : memref<1x1xf32, #tpu.memory_space<vmem>>, vector<1x1xf32>
    tpu.vector_store %arg6[%c0_14, %c0_15], %26 {strides = array<i32>} : memref<1x1xf32, #tpu.memory_space<vmem>>, vector<1x1xf32>,
    %28 = arith.minsi %23, %21 : vector<1x1xi32>
    %29 = arith.select %25, %28, %23 : vector<1x1xi1>, vector<1x1xi32>
    %30 = arith.select %24, %21, %29 : vector<1x1xi1>, vector<1x1xi32>
    %c0_16 = arith.constant 0 : index
    %c0_17 = arith.constant 0 : index
    %31 = vector.load %arg7[%c0_16, %c0_17] : memref<1x1xi32, #tpu.memory_space<vmem>>, vector<1x1xi32>
    tpu.vector_store %arg7[%c0_16, %c0_17], %30 {strides = array<i32>} : memref<1x1xi32, #tpu.memory_space<vmem>>, vector<1x1xi32>,
    %c2_i32 = arith.constant 2 : i32
    %32 = arith.cmpi eq, %arg0, %c2_i32 : i32
    %33 = arith.extui %32 : i1 to i32
    %c0_i32_18 = arith.constant 0 : i32
    %34 = arith.cmpi ne, %33, %c0_i32_18 : i32
    scf.if %34 {
      %c0_19 = arith.constant 0 : index
      %c0_20 = arith.constant 0 : index
      %35 = vector.load %arg7[%c0_19, %c0_20] : memref<1x1xi32, #tpu.memory_space<vmem>>, vector<1x1xi32>
      %36 = vector.extract %35[0, 0] : i32 from vector<1x1xi32>
      %c0_21 = arith.constant 0 : index
      %37 = memref.load %arg3[%c0_21] : memref<1xi32, #tpu.memory_space<smem>>
      memref.store %36, %arg3[%c0_21] : memref<1xi32, #tpu.memory_space<smem>>
    } else {
    }
    return
  }
  func.func @transform_0(%arg0: i32) -> (i32, i32) {
    %c0_i32 = arith.constant 0 : i32
    %c0_i32_0 = arith.constant 0 : i32
    %c0_i32_1 = arith.constant 0 : i32
    return %c0_i32, %c0_i32_0 : i32, i32
  }
  func.func @transform_1(%arg0: i32) -> (i32, i32) {
    %c0_i32 = arith.constant 0 : i32
    %c0_i32_0 = arith.constant 0 : i32
    return %c0_i32, %arg0 : i32, i32
  }
  func.func @transform_2(%arg0: i32) -> i32 {
    %c0_i32 = arith.constant 0 : i32
    %c0_i32_0 = arith.constant 0 : i32
    return %c0_i32 : i32
  }
}

</mosaic_0001>

<llo_original>
// kernel: knn_forward.1
$region0: #{knn_forward.1}
  #allocation0 [shape = 'u32[]', space=smem, size = 0x4, offset = 0x4, fixed_abs, tag = 'smem constant byte address 0x4 - core index']
  #allocation1 [shape = 'u32[72,128]{1,0:T(1,128)}', space=vmem, size = 0x9000, scoped, tag = 'internal scratch']
  #allocation2 [shape = 'bf16[8,128]{1,0:T(8,128)(2,1)}', space=vmem, size = 0x800, scoped, tag = 'scratch operand']
  #allocation3 [shape = 's32[8,128]{1,0:T(8,128)}', space=vmem, size = 0x1000, scoped, tag = 'scratch operand']
  #allocation4 [shape = 'f32[1,1]{1,0:T(1,128)}', space=vmem, size = 0x200, scoped, tag = 'scratch operand']
  #allocation5 [shape = 's32[1,1]{1,0:T(1,128)}', space=vmem, size = 0x200, scoped, tag = 'scratch operand']
  %s0 = inlined_call_operand.vmem [shape: f32[8,128], index: 0, kind: input, shape index: {}]
  %s1 = inlined_call_operand.hbm [shape: bf16[128,384], index: 1, kind: input, shape index: {}]
  %s2 = inlined_call_operand.hbm [shape: s32[1], index: 2, kind: output, shape index: {}]
  %s3 = sld [smem:[#allocation0]]
  $region53: #{knn_forward.1} parent=0
    _
  %s5 = ssub.s32 1, %s3
  %s6 = scalar_select 0, %s5, %s3
  $region1: #{knn_forward.1} parent=0
    #allocation6 [shape = 'u8[65536]{0}', space=vmem, size = 0x10000, scoped, tag = 'input window, operand 1']
    #allocation7 [shape = 's32[2]{0}', space=sflag, size = 0x8, scoped, tag = 'scoped memory for knn_forward.1']
    #allocation8 [shape = 's32[2]{0}', space=sflag, size = 0x8, scoped, tag = 'scoped memory for knn_forward.1']
    #allocation9 [shape = 'u8[512]{0}', space=smem, size = 0x200, scoped, tag = 'output window, operand 0, single buffered']
    %7 = vsyncpa [#allocation7], 0
    %s8 = scalar_lea.sflag [#allocation7], 1
    %9 = vsyncpa %s8, 0
    %10 = vsyncpa [#allocation8], 0
    loop: start=0, step=1, limit=5
    $region2: #{knn_forward.1} parent=1 // loop_pre_header
      _
    $region3: #{knn_forward.1} parent=1 // loop_header
      %s12 = sphi 0, %s16
      %p13 = scmp.ge.s32.totalorder %s12, 5
      %s20 = sphi 0, %s20
      %s22 = sphi 0, %s20
      %s23 = sphi 0, %s22
      %s37 = sphi 0, %s23
      %s43 = sphi 0, %s45
      %s46 = sphi 0, %s43
      %s47 = sphi 0, %s46
      %s63 = sphi 0, %s47
      %s67 = sphi 0, %s67
      %s69 = sphi 0, %s67
      %s70 = sphi 0, %s69
      %s84 = sphi 0, %s70
    $region4: #{knn_forward.1} parent=1 // loop_header_branch
      %15 = sbr.rel (%p13) target = $region8
    $region5: #{knn_forward.1} parent=1 // loop_body
      %s17 = ssub.s32 %s12, 1
      %s18 = ssub.s32 %s12, 2
      %s19 = sadd.s32 %s12, 1
      %s21 = sadd.s32 %s20, 1
      %p24 = scmp.eq.s32.totalorder %s12, 2
      %p25 = scmp.ne.s32.totalorder %s20, %s22
      %p26 = scmp.eq.s32.totalorder %s12, 0
      %p27 = por %p25, %p26
      %p28 = scmp.ne.s32.totalorder %s20, %s22
      %p29 = scmp.eq.s32.totalorder %s17, 2
      %p30 = por %p28, %p29
      %p31 = scmp.ne.s32.totalorder %s22, %s23
      %p32 = scmp.eq.s32.totalorder %s17, 0
      %p33 = por %p31, %p32
      %p34 = scmp.ne.s32.totalorder %s22, %s23
      %p35 = scmp.eq.s32.totalorder %s18, 2
      %p36 = por %p34, %p35
      %p38 = scmp.ne.s32.totalorder %s23, %s37
      %p39 = scmp.eq.s32.totalorder %s18, 0
      %p40 = por %p38, %p39
      %s41 = ssub.s32 %s12, %s19
      %p42 = scmp.eq.s32.totalorder %s41, 0
      %s44 = sadd.s32 %s43, 1
      %s45 = scalar_select %p42, %s43, %s44
      %p48 = pneg %p42
      %p49 = scmp.eq.s32.totalorder %s12, 2
      %p50 = por %p48, %p49
      %p51 = scmp.ne.s32.totalorder %s43, %s46
      %p52 = scmp.eq.s32.totalorder %s12, 0
      %p53 = por %p51, %p52
      %p54 = scmp.ne.s32.totalorder %s43, %s46
      %p55 = scmp.eq.s32.totalorder %s17, 2
      %p56 = por %p54, %p55
      %p57 = scmp.ne.s32.totalorder %s46, %s47
      %p58 = scmp.eq.s32.totalorder %s17, 0
      %p59 = por %p57, %p58
      %p60 = scmp.ne.s32.totalorder %s46, %s47
      %p61 = scmp.eq.s32.totalorder %s18, 2
      %p62 = por %p60, %p61
      %p64 = scmp.ne.s32.totalorder %s47, %s63
      %p65 = scmp.eq.s32.totalorder %s18, 0
      %p66 = por %p64, %p65
      %s68 = sadd.s32 %s67, 1
      %p71 = scmp.eq.s32.totalorder %s12, 2
      %p72 = scmp.ne.s32.totalorder %s67, %s69
      %p73 = scmp.eq.s32.totalorder %s12, 0
      %p74 = por %p72, %p73
      %p75 = scmp.ne.s32.totalorder %s67, %s69
      %p76 = scmp.eq.s32.totalorder %s17, 2
      %p77 = por %p75, %p76
      %p78 = scmp.ne.s32.totalorder %s69, %s70
      %p79 = scmp.eq.s32.totalorder %s17, 0
      %p80 = por %p78, %p79
      %p81 = scmp.ne.s32.totalorder %s69, %s70
      %p82 = scmp.eq.s32.totalorder %s18, 2
      %p83 = por %p81, %p82
      %p85 = scmp.ne.s32.totalorder %s70, %s84
      %p86 = scmp.eq.s32.totalorder %s18, 0
      %p87 = por %p85, %p86
      %p88 = scmp.le.s32.totalorder 1, %s12
      %p89 = scmp.lt.s32.totalorder %s12, 4
      %p90 = pnand %p88, %p89
      %p91 = pneg %p90
      // Predicated region
      $region9: #{knn_forward.1} parent=5 // pred_check
        _
      $region10: #{knn_forward.1} parent=5 // pred_check_branch
        %93 = sbr.rel (%p90) target = $region12
      $region11: #{knn_forward.1} parent=5 // pred_region
        %s94 = ssub.s32 %s12, 1
        // Predicated region
        $region13: #{knn_forward.1} parent=11 // pred_check
          %p95 = pneg %p33
        $region14: #{knn_forward.1} parent=11 // pred_check_branch
          %97 = sbr.rel (%p95) target = $region16
        $region15: #{knn_forward.1} parent=11 // pred_region
          _
        $region16: #{knn_forward.1} parent=11 // pred_fallthru
          _
      $region12: #{knn_forward.1} parent=5 // pred_fallthru
        _
      %p98 = scmp.lt.s32.totalorder %s12, 3
      // Predicated region
      $region17: #{knn_forward.1} parent=5 // pred_check
        %p99 = pneg %p98
      $region18: #{knn_forward.1} parent=5 // pred_check_branch
        %101 = sbr.rel (%p99) target = $region20
      $region19: #{knn_forward.1} parent=5 // pred_region
        // Predicated region
        $region21: #{knn_forward.1} parent=19 // pred_check
          %p102 = pneg %p53
        $region22: #{knn_forward.1} parent=19 // pred_check_branch
          %104 = sbr.rel (%p102) target = $region24
        $region23: #{knn_forward.1} parent=19 // pred_region
          %s105 = sand.u32 %s43, 1
          %s106 = scalar_lea.sflag [#allocation7], %s105
          %s107 = sand.u32 %s43, 1
          %s108 = smul.addr %s107, 64
          %s109 = scalar_lea.vmem [#allocation6], %s108
          %111 = vsyncadd %s106, 0
          %s112 = smul.addr %s12, 4
          %s113 = scalar_lea.hbm %s1, %s112
          %s114 = sshll.u32 %s113, 4
          %s115 = int_to_ptr.hbm [resolvable:$true] %s114
          %s116 = sshll.u32 %s109, 4
          %s117 = int_to_ptr.vmem [resolvable:$true] %s116
          %122 = dma.hbm_to_vmem [thread:$0]  %s115, 1024, %s117, %s106, 192, 64, 4
        $region24: #{knn_forward.1} parent=19 // pred_fallthru
          _
      $region20: #{knn_forward.1} parent=5 // pred_fallthru
        _
      %p123 = scmp.le.s32.totalorder 1, %s12
      %p124 = scmp.lt.s32.totalorder %s12, 4
      %p125 = pnand %p123, %p124
      %p126 = pneg %p125
      // Predicated region
      $region25: #{knn_forward.1} parent=5 // pred_check
        _
      $region26: #{knn_forward.1} parent=5 // pred_check_branch
        %128 = sbr.rel (%p125) target = $region28
      $region27: #{knn_forward.1} parent=5 // pred_region
        %s129 = ssub.s32 %s12, 1
        %s130 = sand.u32 %s46, 1
        %s131 = scalar_lea.sflag [#allocation7], %s130
        %s132 = sand.u32 %s46, 1
        %s133 = smul.addr %s132, 64
        %s134 = scalar_lea.vmem [#allocation6], %s133
        // Predicated region
        $region29: #{knn_forward.1} parent=27 // pred_check
          %p135 = pneg %p59
        $region30: #{knn_forward.1} parent=27 // pred_check_branch
          %137 = sbr.rel (%p135) target = $region32
        $region31: #{knn_forward.1} parent=27 // pred_region
          %139 = dma.done %s131, 1024
        $region32: #{knn_forward.1} parent=27 // pred_fallthru
          _
        %p140 = pneg %p33
        %p141 = pneg %p30
        %s142 = sand.u32 %s46, 1
        %s143 = scalar_lea.sflag [#allocation7], %s142
        %s144 = sand.u32 %s46, 1
        %s145 = smul.addr %s144, 64
        %s146 = scalar_lea.vmem [#allocation6], %s145
        %p147 = pneg %p59
        %p148 = pneg %p56
        %p149 = pneg %p80
        %p150 = pneg %p77
        %p151 = scmp.eq.s32.totalorder %s17, 0
        // Predicated region
        $region33: #{knn_forward.1} parent=27 // pred_check
          %p152 = pneg %p151
        $region34: #{knn_forward.1} parent=27 // pred_check_branch
          %154 = sbr.rel (%p152) target = $region36
        $region35: #{knn_forward.1} parent=27 // pred_region
          %v155 = vld [vmem:[%s0] sm:$0xff]
          %v156 = vmul.f32 %v155, %v155
          %157 = vadd.xlane.f32.xlu0 %v156
          %v158 = vpop.xlane.xlu0 %157
          %v159 = vmax.f32 %v158, 1e-24
          %v160 = vrsqrt.pop %v159
          %v161 = vmul.f32 %v160, %v159
          %v162 = vmul.f32 %v161, %v160
          %v163 = vmul.f32 0.5, %v162
          %v164 = vsub.f32 1.5, %v163
          %v165 = vmul.f32 %v160, %v164
          %vm166 = vweird.f32 %v159
          %vm167 = vweird.f32 %v160
          %vm168 = vmor %vm166, %vm167
          %v169 = vsel %vm168, %v160, %v165
          %v170 = vmul.f32 %v155, %v169
          %v171 = vpack.c.bf16 %v170, %v170
          %172 = vst [vmem:[#allocation2] sm:$0xf] %v171
          %v173 = vlaneseq
          %v174 = vshrl.u32 %v173, 7
          %v175 = vlaneseq
          %v176 = vand.u32 %v175, 127
          %v177 = vmul.u32 %v174, 300
          %v178 = vadd.s32 %v177, %v176
          %179 = vst [vmem:[#allocation3] sm:$0xff] %v178
          %vm180 = vcmask 0
          %181 = vst.msk [vmem:[#allocation4] sm:$0x1] %vm180, -inf
          %182 = vst.msk [vmem:[#allocation5] sm:$0x1] %vm180, 2147483647
        $region36: #{knn_forward.1} parent=27 // pred_fallthru
          _
        %v183 = vld [vmem:[#allocation2] sm:$0xf]
        %v184 = vld [vmem:[%s134] sm:$0xf]
        %v185 = vld [vmem:[%s134 + $0x4] sm:$0xf]
        %v186 = vld [vmem:[%s134 + $0x8] sm:$0xf]
        %v187 = vld [vmem:[%s134 + $0xc] sm:$0xf]
        %v188 = vld [vmem:[%s134 + $0x10] sm:$0xf]
        %v189 = vld [vmem:[%s134 + $0x14] sm:$0xf]
        %v190 = vld [vmem:[%s134 + $0x18] sm:$0xf]
        %v191 = vld [vmem:[%s134 + $0x1c] sm:$0xf]
        %v192 = vld [vmem:[%s134 + $0x20] sm:$0xf]
        %v193 = vld [vmem:[%s134 + $0x24] sm:$0xf]
        %v194 = vld [vmem:[%s134 + $0x28] sm:$0xf]
        %v195 = vld [vmem:[%s134 + $0x2c] sm:$0xf]
        %v196 = vld [vmem:[%s134 + $0x30] sm:$0xf]
        %v197 = vld [vmem:[%s134 + $0x34] sm:$0xf]
        %v198 = vld [vmem:[%s134 + $0x38] sm:$0xf]
        %v199 = vld [vmem:[%s134 + $0x3c] sm:$0xf]
        %v216 = vunpack.c.l.b16 %v184
        %v217 = vunpack.c.l.b16 %v185
        %v218 = vunpack.c.l.b16 %v186
        %v219 = vunpack.c.l.b16 %v187
        %v220 = vunpack.c.l.b16 %v188
        %v221 = vunpack.c.l.b16 %v189
        %v222 = vunpack.c.l.b16 %v190
        %v223 = vunpack.c.l.b16 %v191
        %v224 = vunpack.c.l.b16 %v192
        %v225 = vunpack.c.l.b16 %v193
        %v226 = vunpack.c.l.b16 %v194
        %v227 = vunpack.c.l.b16 %v195
        %v228 = vunpack.c.l.b16 %v196
        %v229 = vunpack.c.l.b16 %v197
        %v230 = vunpack.c.l.b16 %v198
        %v231 = vunpack.c.l.b16 %v199
        %v232 = vpack.c.b16 %v217, %v216
        %v233 = vpack.c.b16 %v219, %v218
        %v234 = vpack.c.b16 %v221, %v220
        %v235 = vpack.c.b16 %v223, %v222
        %v236 = vpack.c.b16 %v225, %v224
        %v237 = vpack.c.b16 %v227, %v226
        %v238 = vpack.c.b16 %v229, %v228
        %v239 = vpack.c.b16 %v231, %v230
        %248 = vmatpush.bf16.msra.mxu0 %v239
        %249 = vmatpush.bf16.msra.mxu0 %v238
        %250 = vmatpush.bf16.msra.mxu0 %v237
        %251 = vmatpush.bf16.msra.mxu0 %v236
        %252 = vmatpush.bf16.msra.mxu0 %v235
        %253 = vmatpush.bf16.msra.mxu0 %v234
        %254 = vmatpush.bf16.msra.mxu0 %v233
        %255 = vmatpush.bf16.msra.mxu0 %v232
        %256 = vmatmul.bf16.gmra.mxu0 %v183
        %v257 = vpop.f32.mrf.mxu0
        %v258 = vadd.f32 0.0, %v257
        %v259 = vpop.f32.mrf.mxu0
        %260 = vdwg.mxu0
        %v261 = vld [vmem:[#allocation3] sm:$0xff]
        %s262 = smul.u32 %s17, 128
        %v263 = vstv %s262
        %v264 = vadd.s32 %v261, %v263
        %265 = vmax.xlane.f32.xlu0 %v258
        %v266 = vpop.xlane.xlu0 %265
        %v267 = vrot.slane %v266, 4
        %v268 = vmax.f32 %v266, %v267
        %v269 = vrot.slane %v268, 2
        %v270 = vmax.f32 %v268, %v269
        %v271 = vrot.slane %v270, 1
        %v272 = vmax.f32 %v270, %v271
        %vm273 = vcmp.eq.f32.partialorder %v258, %v272
        %v274 = vsel %vm273, %v264, 2147483647
        %v275 = vand.u32 %v274, 65535
        %v276 = vshra.s32 %v274, 16
        %v277 = vcvt.s32.f32 %v275
        %v278 = vcvt.s32.f32 %v276
        %279 = vmin.xlane.f32.xlu0 %v278
        %v280 = vpop.xlane.xlu0 %279
        %vm281 = vcmp.eq.f32.partialorder %v278, %v280
        %v282 = vsel %vm281, %v277, inf
        %283 = vmin.xlane.f32.xlu0 %v282
        %v284 = vpop.xlane.xlu0 %283
        %v285 = vcvt.f32.s32 %v284
        %v286 = vcvt.f32.s32 %v280
        %v287 = vshll.u32 %v286, 16
        %v288 = vadd.s32 %v287, %v285
        %v289 = vrot.slane %v288, 4
        %vm290 = vcmp.lt.s32.totalorder %v288, %v289
        %v291 = vsel %vm290, %v288, %v289
        %v292 = vrot.slane %v291, 2
        %vm293 = vcmp.lt.s32.totalorder %v291, %v292
        %v294 = vsel %vm293, %v291, %v292
        %v295 = vrot.slane %v294, 1
        %vm296 = vcmp.lt.s32.totalorder %v294, %v295
        %v297 = vsel %vm296, %v294, %v295
        %v298 = vld [vmem:[#allocation4] sm:$0x1]
        %v299 = vld [vmem:[#allocation5] sm:$0x1]
        %vm300 = vcmp.gt.f32.partialorder %v272, %v298
        %vm301 = vcmp.eq.f32.partialorder %v272, %v298
        %v302 = vmax.f32 %v298, %v272
        %vm303 = vcmask 0
        %304 = vst.msk [vmem:[#allocation4] sm:$0x1] %vm303, %v302
        %vm305 = vcmp.lt.s32.totalorder %v299, %v297
        %v306 = vsel %vm305, %v299, %v297
        %v307 = vsel %vm301, %v306, %v299
        %v308 = vsel %vm300, %v297, %v307
        %309 = vst.msk [vmem:[#allocation5] sm:$0x1] %vm303, %v308
        %p310 = scmp.eq.s32.totalorder %s17, 2
        // Predicated region
        $region37: #{knn_forward.1} parent=27 // pred_check
          %p311 = pneg %p310
        $region38: #{knn_forward.1} parent=27 // pred_check_branch
          %313 = sbr.rel (%p311) target = $region40
        $region39: #{knn_forward.1} parent=27 // pred_region
          %v314 = vld [vmem:[#allocation5] sm:$0x1]
          %s315 = vtos %v314
          %s316 = scalar_lea.smem [#allocation9], 0
          %317 = sst [smem:[%s316]] %s315
        $region40: #{knn_forward.1} parent=27 // pred_fallthru
          _
        // Predicated region
        $region41: #{knn_forward.1} parent=27 // pred_check
          %p318 = pneg %p77
        $region42: #{knn_forward.1} parent=27 // pred_check_branch
          %320 = sbr.rel (%p318) target = $region44
        $region43: #{knn_forward.1} parent=27 // pred_region
          %322 = vsyncadd [#allocation8], 0
          %s324 = sshll.u32 %s2, 4
          %s325 = int_to_ptr.hbm [resolvable:$true] %s324
          %327 = dma.smem_to_hbm [#allocation9], 16, %s325, [#allocation8]
        $region44: #{knn_forward.1} parent=27 // pred_fallthru
          _
        // Predicated region
        $region45: #{knn_forward.1} parent=27 // pred_check
          %p328 = pneg %p77
        $region46: #{knn_forward.1} parent=27 // pred_check_branch
          %330 = sbr.rel (%p328) target = $region48
        $region47: #{knn_forward.1} parent=27 // pred_region
          %332 = dma.done [#allocation8], 16
        $region48: #{knn_forward.1} parent=27 // pred_fallthru
          _
        %333 = sfence
      $region28: #{knn_forward.1} parent=5 // pred_fallthru
        _
      %p334 = scmp.le.s32.totalorder 2, %s12
      // Predicated region
      $region49: #{knn_forward.1} parent=5 // pred_check
        %p335 = pneg %p334
      $region50: #{knn_forward.1} parent=5 // pred_check_branch
        %337 = sbr.rel (%p335) target = $region52
      $region51: #{knn_forward.1} parent=5 // pred_region
        %s338 = ssub.s32 %s12, 2
      $region52: #{knn_forward.1} parent=5 // pred_fallthru
        _
    $region6: #{knn_forward.1} parent=1 // loop_footer
      %s16 = sadd.s32 1, %s12
    $region7: #{knn_forward.1} parent=1 // loop_footer_branch
      %11 = sbr.rel target = $region3
    $region8: #{knn_forward.1} parent=1 // loop_exit
      _
    %339 = vsyncpa [#allocation7], 1
    %s340 = scalar_lea.sflag [#allocation7], 1
    %341 = vsyncpa %s340, 1
    %342 = vsyncpa [#allocation8], 1
    %s343 = scalar_lea.sflag [#allocation8], 1
    %344 = vsyncpa %s343, 1

</llo_original>
